<compile_context>
chip_gen: v7x
topology: tpu7x:2x2x1
jax: 0.10.0
libtpu: 0.0.40
codegen_flags: <defaults>
</compile_context>

<pallas_src>
import functools

import jax
import jax.numpy as jnp
import numpy as np
from jax.experimental import pallas as pl
from jax.experimental.pallas import tpu as pltpu


def _round_up(x: int, m: int) -> int:
    return ((x + m - 1) // m) * m


def _cdiv(a: int, b: int) -> int:
    return -(-a // b)


def _moving_avg_kernel(a_ref, x_ref, o_ref, xp_ref, *,
                       L, pad, L_scr, TL, SB, n_sub, W, K, stride, use_mxu):
    """One grid step = (lane tile i, output-row tile j).

    a_ref : (SB, W)     banded averaging matrix (1/K on the band), f32
    x_ref : (L, TN)     unpadded input lane tile (resident across j)
    o_ref : (TL, TN)    output tile
    xp_ref: (L_scr, TN) VMEM scratch: replicate-edge padded lane tile
    """
    j = pl.program_id(1)
    TN = o_ref.shape[-1]

    # Build the replicate-edge padded copy of this lane tile once per lane
    # tile (j is the innermost grid axis, so j == 0 marks a fresh lane tile).
    # This fuses the torch `repeat + cat` padding into the kernel.
    @pl.when(j == 0)
    def _build_padded():
        xp_ref[pl.ds(pad, L), :] = x_ref[...]
        if pad > 0:
            xp_ref[pl.ds(0, pad), :] = jnp.broadcast_to(
                x_ref[0:1, :], (pad, TN))
        tail = L_scr - (pad + L)
        if tail > 0:
            xp_ref[pl.ds(pad + L, tail), :] = jnp.broadcast_to(
                x_ref[L - 1:L, :], (tail, TN))

    base = j * (TL * stride)
    if (TL * stride) % 8 == 0:
        base = pl.multiple_of(base, 8)  # sub-block starts stay sublane aligned

    for s in range(n_sub):
        start = base + s * (SB * stride)
        if use_mxu:
            # Banded matmul: offloads the O(K) reduction to the otherwise-idle
            # MXU and handles stride without strided sublane loads.  Mosaic
            # performs f32 matmuls with multi-pass MXU precision.
            slab = xp_ref[pl.ds(start, W), :].astype(jnp.float32)
            acc = jnp.dot(a_ref[...], slab, preferred_element_type=jnp.float32)
        else:
            # Small kernel_size, stride == 1: exact unrolled f32 adds on the
            # VPU (per sub-block so the accumulator stays small).
            acc = xp_ref[pl.ds(start, SB), :].astype(jnp.float32)
            for k in range(1, K):
                acc = acc + xp_ref[pl.ds(start + k, SB), :].astype(jnp.float32)
            acc = acc * (1.0 / K)
        o_ref[pl.ds(s * SB, SB), :] = acc.astype(o_ref.dtype)


def moving_avg(x, kernel_size, stride=1):
    """Pallas TPU equivalent of the torch `moving_avg` module.

    x: (B, L, C) -> (B, L_out, C)
    """
    B, L, C = x.shape
    K = int(kernel_size)
    stride = int(stride)
    pad = (K - 1) // 2
    L_pad = L + 2 * pad
    L_out = (L_pad - K) // stride + 1
    if L_out <= 0:
        raise ValueError("kernel_size too large for sequence length")

    dtype = x.dtype
    itemsize = jnp.dtype(dtype).itemsize
    N = B * C
    N_al = _round_up(N, 128)

    # Lane-dense layout: (B, L, C) -> (L, B*C); lane axis padded to a multiple
    # of 128 so every vector store is a full unmasked 128-lane write.
    xt = jnp.transpose(x, (1, 0, 2)).reshape(L, N)
    if N_al != N:
        xt = jnp.pad(xt, ((0, 0), (0, N_al - N)))

    # ---- tiling -------------------------------------------------------------
    TL = L_out if L_out <= 512 else 512          # output rows per grid step
    SB = 128 if TL % 128 == 0 else TL            # rows per MXU sub-block
    n_sub = TL // SB
    n_j = _cdiv(L_out, TL)                       # ragged last tile is masked on write
    W = (SB - 1) * stride + K                    # padded rows feeding one sub-block
    L_span = (n_j * TL - 1) * stride + K         # padded rows touched by all tiles
    L_scr = max(L_span, pad + L)                 # scratch rows (input + both edges)

    # Lane-tile width: biggest of 256/128 dividing the padded lane axis while
    # keeping (double-buffered input + output + scratch) well inside VMEM.
    # TODO(synk): for very long sequences (L >> 10k) switch the full-L-resident
    # input block to windowed L blocks instead.
    per_lane_bytes = (2 * L + 2 * TL + L_scr) * itemsize
    TN = 128
    for cand in (256, 128):
        if N_al % cand == 0 and per_lane_bytes * cand <= 20 * 1024 * 1024:
            TN = cand
            break
    n_i = N_al // TN

    # Large kernels / strided pooling -> MXU banded matmul; small stride-1
    # kernels -> exact unrolled adds.
    use_mxu = (K > 16) or (stride != 1)

    # Banded averaging matrix: A[o, r] = 1/K  iff  o*stride <= r < o*stride + K.
    o_idx = np.arange(SB)[:, None]
    r_idx = np.arange(W)[None, :]
    band = (r_idx >= o_idx * stride) & (r_idx < o_idx * stride + K)
    a_mat = jnp.asarray(band.astype(np.float32) / float(K))

    kernel = functools.partial(
        _moving_avg_kernel, L=L, pad=pad, L_scr=L_scr, TL=TL, SB=SB,
        n_sub=n_sub, W=W, K=K, stride=stride, use_mxu=use_mxu)

    out2d = pl.pallas_call(
        kernel,
        out_shape=jax.ShapeDtypeStruct((L_out, N_al), dtype),
        grid_spec=pltpu.PrefetchScalarGridSpec(
            num_scalar_prefetch=0,
            grid=(n_i, n_j),   # lane tiles (parallel) x L_out tiles (arbitrary)
            in_specs=[
                pl.BlockSpec((SB, W), lambda i, j: (0, 0)),   # band matrix (resident)
                pl.BlockSpec((L, TN), lambda i, j: (0, i)),   # input tile (resident over j)
            ],
            out_specs=pl.BlockSpec((TL, TN), lambda i, j: (j, i)),
            scratch_shapes=[pltpu.VMEM((L_scr, TN), dtype)],
        ),
        compiler_params=pltpu.CompilerParams(
            dimension_semantics=("parallel", "arbitrary"),
            vmem_limit_bytes=32 * 1024 * 1024,
        ),
    )(a_mat, xt)

    # Undo the lane-dense layout: (L_out, B*C) -> (B, L_out, C).
    out = out2d[:, :N].reshape(L_out, B, C)
    return jnp.transpose(out, (1, 0, 2))


def moving_avg_ref(x, kernel_size, stride):
    """Pure-JAX reference (torch AvgPool1d with edge replication)."""
    pad = (kernel_size - 1) // 2
    front = jnp.repeat(x[:, 0:1, :], pad, axis=1)
    end = jnp.repeat(x[:, -1:, :], pad, axis=1)
    xp = jnp.concatenate([front, x, end], axis=1)
    L_pad = xp.shape[1]
    L_out = (L_pad - kernel_size) // stride + 1
    windows = jnp.stack(
        [xp[:, k:k + (L_out - 1) * stride + 1:stride, :]
         for k in range(kernel_size)],
        axis=0,
    )
    return jnp.mean(windows, axis=0)


if __name__ == "__main__":
    key = jax.random.PRNGKey(0)
    # ((B, L, C), kernel_size, stride)
    cases = [
        ((2, 96, 7), 25, 1),    # Autoformer/DLinear default trend kernel (MXU path)
        ((2, 8, 32), 5, 1),     # small odd kernel (exact unrolled-add path)
        ((4, 640, 33), 25, 1),  # multiple L_out tiles + ragged last tile + lane padding
        ((2, 64, 5), 6, 2),     # even kernel + stride 2 (MXU path, no strided loads)
    ]

    for shape, ks, st in cases:
        key, sub = jax.random.split(key)
        x = jax.random.normal(sub, shape, dtype=jnp.float32)

        out = jax.block_until_ready(moving_avg(x, ks, st))
        ref = moving_avg_ref(x, ks, st)

        assert out.shape == ref.shape, (shape, ks, st, out.shape, ref.shape)
        # MXU-path tolerance allows for multi-pass / reduced-precision f32
        # matmul on some TPU generations; structural errors would be >> this.
        mxu_path = (ks > 16) or (st != 1)
        tol = 5e-3 if mxu_path else 1e-5
        assert jnp.allclose(out, ref, rtol=tol, atol=tol), \
            f"mismatch vs reference for shape={shape} K={ks} stride={st}"

    print("KERNEL_OK")
</pallas_src>

<mosaic_0001>
module attributes {stable_mosaic.version = 11 : i64} {
  func.func @_moving_avg_kernel(%arg0: i32, %arg1: i32, %arg2: memref<96x120xf32, #tpu.memory_space<vmem>>, %arg3: memref<96x128xf32, #tpu.memory_space<vmem>>, %arg4: memref<96x128xf32, #tpu.memory_space<vmem>>, %arg5: memref<120x128xf32, #tpu.memory_space<vmem>>) attributes {dimension_semantics = [#tpu.dimension_semantics<parallel>, #tpu.dimension_semantics<arbitrary>], iteration_bounds = array<i64: 1, 1>, scalar_prefetch = 0 : i64, scratch_operands = 1 : i64, tpu.core_type = #tpu.core_type<tc>, window_params = [{pipeline_mode = #tpu.pipeline_mode<synchronous>, transform_indices = @transform_0, window_bounds = array<i64: 96, 120>}, {transform_indices = @transform_1, window_bounds = array<i64: 96, 128>}, {transform_indices = @transform_2, window_bounds = array<i64: 96, 128>}]} {
    %c0_i32 = arith.constant 0 : i32
    %0 = arith.cmpi eq, %arg1, %c0_i32 : i32
    %1 = arith.extui %0 : i1 to i32
    %c0_i32_0 = arith.constant 0 : i32
    %2 = arith.cmpi ne, %1, %c0_i32_0 : i32
    scf.if %2 {
      %c0_6 = arith.constant 0 : index
      %c0_7 = arith.constant 0 : index
      %11 = vector.load %arg3[%c0_6, %c0_7] : memref<96x128xf32, #tpu.memory_space<vmem>>, vector<96x128xf32>
      %c12 = arith.constant 12 : index
      %c0_8 = arith.constant 0 : index
      %12 = vector.load %arg5[%c12, %c0_8] : memref<120x128xf32, #tpu.memory_space<vmem>>, vector<96x128xf32>
      tpu.vector_store %arg5[%c12, %c0_8], %11 {strides = array<i32>} : memref<120x128xf32, #tpu.memory_space<vmem>>, vector<96x128xf32>,
      %c0_9 = arith.constant 0 : index
      %c0_10 = arith.constant 0 : index
      %13 = vector.load %arg3[%c0_9, %c0_10] : memref<96x128xf32, #tpu.memory_space<vmem>>, vector<1x128xf32>
      %14 = vector.shape_cast %13 : vector<1x128xf32> to vector<1x128xf32>
      %15 = vector.broadcast %14 : vector<1x128xf32> to vector<12x128xf32>
      %c0_11 = arith.constant 0 : index
      %c0_12 = arith.constant 0 : index
      %16 = vector.load %arg5[%c0_11, %c0_12] : memref<120x128xf32, #tpu.memory_space<vmem>>, vector<12x128xf32>
      tpu.vector_store %arg5[%c0_11, %c0_12], %15 {strides = array<i32>} : memref<120x128xf32, #tpu.memory_space<vmem>>, vector<12x128xf32>,
      %c95 = arith.constant 95 : index
      %c0_13 = arith.constant 0 : index
      %17 = vector.load %arg3[%c95, %c0_13] : memref<96x128xf32, #tpu.memory_space<vmem>>, vector<1x128xf32>
      %18 = vector.shape_cast %17 : vector<1x128xf32> to vector<1x128xf32>
      %19 = vector.broadcast %18 : vector<1x128xf32> to vector<12x128xf32>
      %c108 = arith.constant 108 : index
      %c0_14 = arith.constant 0 : index
      %20 = vector.load %arg5[%c108, %c0_14] : memref<120x128xf32, #tpu.memory_space<vmem>>, vector<12x128xf32>
      tpu.vector_store %arg5[%c108, %c0_14], %19 {strides = array<i32>} : memref<120x128xf32, #tpu.memory_space<vmem>>, vector<12x128xf32>,
    } else {
    }
    %c96_i32 = arith.constant 96 : i32
    %3 = arith.muli %arg1, %c96_i32 : i32
    %4 = tpu.assume_multiple %3, 8 : i32
    %c0_i32_1 = arith.constant 0 : i32
    %5 = arith.addi %4, %c0_i32_1 : i32
    %6 = arith.index_cast %5 : i32 to index
    %c0 = arith.constant 0 : index
    %7 = vector.load %arg5[%6, %c0] : memref<120x128xf32, #tpu.memory_space<vmem>>, vector<120x128xf32>
    %c0_2 = arith.constant 0 : index
    %c0_3 = arith.constant 0 : index
    %8 = vector.load %arg2[%c0_2, %c0_3] : memref<96x120xf32, #tpu.memory_space<vmem>>, vector<96x120xf32>
    %cst = arith.constant dense<0.000000e+00> : vector<96x128xf32>
    %9 = tpu.matmul %8, %7, %cst {dimension_numbers = #tpu.dot_dimension_numbers<[1], [0], [0], [1], [0, 0, 1, 1], [], []>} : vector<96x120xf32>, vector<120x128xf32>, vector<96x128xf32> -> vector<96x128xf32>
    %c0_4 = arith.constant 0 : index
    %c0_5 = arith.constant 0 : index
    %10 = vector.load %arg4[%c0_4, %c0_5] : memref<96x128xf32, #tpu.memory_space<vmem>>, vector<96x128xf32>
    tpu.vector_store %arg4[%c0_4, %c0_5], %9 {strides = array<i32>} : memref<96x128xf32, #tpu.memory_space<vmem>>, vector<96x128xf32>,
    return
  }
  func.func @transform_0(%arg0: i32, %arg1: i32) -> (i32, i32) {
    %c0_i32 = arith.constant 0 : i32
    %c0_i32_0 = arith.constant 0 : i32
    %c0_i32_1 = arith.constant 0 : i32
    return %c0_i32, %c0_i32_0 : i32, i32
  }
  func.func @transform_1(%arg0: i32, %arg1: i32) -> (i32, i32) {
    %c0_i32 = arith.constant 0 : i32
    %c0_i32_0 = arith.constant 0 : i32
    return %c0_i32, %arg0 : i32, i32
  }
  func.func @transform_2(%arg0: i32, %arg1: i32) -> (i32, i32) {
    %c0_i32 = arith.constant 0 : i32
    return %arg1, %arg0 : i32, i32
  }
}

</mosaic_0001>

<llo_original>
// kernel: tpu_custom_call.1
$region0: #{tpu_custom_call.1}
  #allocation0 [shape = 'u32[]', space=smem, size = 0x4, offset = 0x4, fixed_abs, tag = 'smem constant byte address 0x4 - core index']
  #allocation1 [shape = 'u32[144,128]{1,0:T(1,128)}', space=vmem, size = 0x12000, scoped, tag = 'internal scratch']
  #allocation2 [shape = 'f32[120,128]{1,0:T(8,128)}', space=vmem, size = 0xf000, scoped, tag = 'scratch operand']
  %s0 = inlined_call_operand.hbm [shape: f32[96,120], index: 0, kind: input, shape index: {}]
  %s1 = inlined_call_operand.hbm [shape: f32[96,128], index: 1, kind: input, shape index: {}]
  %s2 = inlined_call_operand.hbm [shape: f32[96,128], index: 2, kind: output, shape index: {}]
  %s3 = sld [smem:[#allocation0]]
  $region30: #{tpu_custom_call.1} parent=0
    _
  %s5 = ssub.s32 1, %s3
  %s6 = scalar_select 0, %s5, %s3
  $region1: #{tpu_custom_call.1} parent=0
    #allocation3 [shape = 'u8[49152]{0}', space=vmem, size = 0xc000, scoped, tag = 'input window, operand 0, single buffered']
    #allocation4 [shape = 's32[1]{0}', space=sflag, size = 0x4, scoped, tag = 'scoped memory for tpu_custom_call.1']
    #allocation5 [shape = 's32[1]{0}', space=sflag, size = 0x4, scoped, tag = 'scoped memory for tpu_custom_call.1']
    #allocation6 [shape = 'u8[49152]{0}', space=vmem, size = 0xc000, scoped, tag = 'input window, operand 1, single buffered']
    #allocation7 [shape = 's32[1]{0}', space=sflag, size = 0x4, scoped, tag = 'scoped memory for tpu_custom_call.1']
    #allocation8 [shape = 'u8[49152]{0}', space=vmem, size = 0xc000, scoped, tag = 'output window, operand 0, single buffered']
    %7 = vsyncpa [#allocation4], 0
    %8 = vsyncpa [#allocation7], 0
    %9 = vsyncpa [#allocation5], 0
    // Predicated region
    $region2: #{tpu_custom_call.1} parent=1 // pred_check
      _
    $region3: #{tpu_custom_call.1} parent=1 // pred_check_branch
      %11 = sbr.rel (0) target = $region5
    $region4: #{tpu_custom_call.1} parent=1 // pred_region
      %s13 = ssub.s32 1536, 1536
      %14 = vsyncadd [#allocation4], %s13
      %s15 = sshll.u32 [#allocation3], 4
      %s16 = int_to_ptr.vmem [resolvable:$true] %s15
      %21 = dma.hbm_to_vmem [thread:$0]  %s0, 1536, %s16, [#allocation4], 128, 128, 8
    $region5: #{tpu_custom_call.1} parent=1 // pred_fallthru
      _
    // Predicated region
    $region6: #{tpu_custom_call.1} parent=1 // pred_check
      _
    $region7: #{tpu_custom_call.1} parent=1 // pred_check_branch
      %23 = sbr.rel (0) target = $region9
    $region8: #{tpu_custom_call.1} parent=1 // pred_region
      %s25 = ssub.s32 1536, 1536
      %26 = vsyncadd [#allocation7], %s25
      %s27 = sshll.u32 [#allocation6], 4
      %s28 = int_to_ptr.vmem [resolvable:$true] %s27
      %33 = dma.hbm_to_vmem [thread:$0]  %s1, 1536, %s28, [#allocation7], 128, 128, 8
    $region9: #{tpu_custom_call.1} parent=1 // pred_fallthru
      _
    // Predicated region
    $region10: #{tpu_custom_call.1} parent=1 // pred_check
      _
    $region11: #{tpu_custom_call.1} parent=1 // pred_check_branch
      %35 = sbr.rel (0) target = $region13
    $region12: #{tpu_custom_call.1} parent=1 // pred_region
      %36 = dma.done [#allocation4], 1536
    $region13: #{tpu_custom_call.1} parent=1 // pred_fallthru
      _
    // Predicated region
    $region14: #{tpu_custom_call.1} parent=1 // pred_check
      _
    $region15: #{tpu_custom_call.1} parent=1 // pred_check_branch
      %38 = sbr.rel (0) target = $region17
    $region16: #{tpu_custom_call.1} parent=1 // pred_region
      %39 = dma.done [#allocation7], 1536
    $region17: #{tpu_custom_call.1} parent=1 // pred_fallthru
      _
    %p40 = scmp.eq.s32.totalorder 0, 0
    // Predicated region
    $region18: #{tpu_custom_call.1} parent=1 // pred_check
      %p41 = pneg %p40
    $region19: #{tpu_custom_call.1} parent=1 // pred_check_branch
      %43 = sbr.rel (%p41) target = $region21
    $region20: #{tpu_custom_call.1} parent=1 // pred_region
      %v44 = vld [vmem:[#allocation6] sm:$0xff]
      %v45 = vld [vmem:[#allocation6 + $0x8] sm:$0xff]
      %v46 = vld [vmem:[#allocation6 + $0x10] sm:$0xff]
      %v47 = vld [vmem:[#allocation6 + $0x18] sm:$0xff]
      %v48 = vld [vmem:[#allocation6 + $0x20] sm:$0xff]
      %v49 = vld [vmem:[#allocation6 + $0x28] sm:$0xff]
      %v50 = vld [vmem:[#allocation6 + $0x30] sm:$0xff]
      %v51 = vld [vmem:[#allocation6 + $0x38] sm:$0xff]
      %v52 = vld [vmem:[#allocation6 + $0x40] sm:$0xff]
      %v53 = vld [vmem:[#allocation6 + $0x48] sm:$0xff]
      %v54 = vld [vmem:[#allocation6 + $0x50] sm:$0xff]
      %v55 = vld [vmem:[#allocation6 + $0x58] sm:$0xff]
      %56 = vst [vmem:[#allocation2 + $0xc] sm:$0xff] %v44
      %57 = vst [vmem:[#allocation2 + $0x14] sm:$0xff] %v45
      %58 = vst [vmem:[#allocation2 + $0x1c] sm:$0xff] %v46
      %59 = vst [vmem:[#allocation2 + $0x24] sm:$0xff] %v47
      %60 = vst [vmem:[#allocation2 + $0x2c] sm:$0xff] %v48
      %61 = vst [vmem:[#allocation2 + $0x34] sm:$0xff] %v49
      %62 = vst [vmem:[#allocation2 + $0x3c] sm:$0xff] %v50
      %63 = vst [vmem:[#allocation2 + $0x44] sm:$0xff] %v51
      %64 = vst [vmem:[#allocation2 + $0x4c] sm:$0xff] %v52
      %65 = vst [vmem:[#allocation2 + $0x54] sm:$0xff] %v53
      %66 = vst [vmem:[#allocation2 + $0x5c] sm:$0xff] %v54
      %67 = vst [vmem:[#allocation2 + $0x64] sm:$0xff] %v55
      %v68 = vld [vmem:[#allocation6] sm:$0x1]
      %v69 = vlaneseq
      %v70 = vshrl.u32 %v69, 7
      %v71 = vsub.s32 0, %v70
      %v72 = vrot.slane %v68, %v71
      %73 = vst [vmem:[#allocation2] sm:$0xff] %v72
      %74 = vst [vmem:[#allocation2 + $0x8] sm:$0xf] %v72
      %v75 = vld [vmem:[#allocation6 + $0x5f] sm:$0x1]
      %v76 = vlaneseq
      %v77 = vshrl.u32 %v76, 7
      %v78 = vsub.s32 0, %v77
      %v79 = vrot.slane %v75, %v78
      %80 = vst [vmem:[#allocation2 + $0x6c] sm:$0xff] %v79
      %81 = vst [vmem:[#allocation2 + $0x74] sm:$0xf] %v79
    $region21: #{tpu_custom_call.1} parent=1 // pred_fallthru
      _
    %s82 = smul.u32 0, 96
    %s83 = scalar_lea.vmem [#allocation2], %s82
    %v84 = vld [vmem:[%s83] sm:$0xff]
    %v85 = vld [vmem:[%s83 + $0x8] sm:$0xff]
    %v86 = vld [vmem:[%s83 + $0x10] sm:$0xff]
    %v87 = vld [vmem:[%s83 + $0x18] sm:$0xff]
    %v88 = vld [vmem:[%s83 + $0x20] sm:$0xff]
    %v89 = vld [vmem:[%s83 + $0x28] sm:$0xff]
    %v90 = vld [vmem:[%s83 + $0x30] sm:$0xff]
    %v91 = vld [vmem:[%s83 + $0x38] sm:$0xff]
    %v92 = vld [vmem:[%s83 + $0x40] sm:$0xff]
    %v93 = vld [vmem:[%s83 + $0x48] sm:$0xff]
    %v94 = vld [vmem:[%s83 + $0x50] sm:$0xff]
    %v95 = vld [vmem:[%s83 + $0x58] sm:$0xff]
    %v96 = vld [vmem:[%s83 + $0x60] sm:$0xff]
    %v97 = vld [vmem:[%s83 + $0x68] sm:$0xff]
    %v98 = vld [vmem:[%s83 + $0x70] sm:$0xff]
    %v99 = vld [vmem:[#allocation3] sm:$0xff]
    %v100 = vld [vmem:[#allocation3 + $0x8] sm:$0xff]
    %v101 = vld [vmem:[#allocation3 + $0x10] sm:$0xff]
    %v102 = vld [vmem:[#allocation3 + $0x18] sm:$0xff]
    %v103 = vld [vmem:[#allocation3 + $0x20] sm:$0xff]
    %v104 = vld [vmem:[#allocation3 + $0x28] sm:$0xff]
    %v105 = vld [vmem:[#allocation3 + $0x30] sm:$0xff]
    %v106 = vld [vmem:[#allocation3 + $0x38] sm:$0xff]
    %v107 = vld [vmem:[#allocation3 + $0x40] sm:$0xff]
    %v108 = vld [vmem:[#allocation3 + $0x48] sm:$0xff]
    %v109 = vld [vmem:[#allocation3 + $0x50] sm:$0xff]
    %v110 = vld [vmem:[#allocation3 + $0x58] sm:$0xff]
    %vm111 = vcmask 982016
    %v113 = vsel %vm111, %v99, 0
    %v116 = vsel %vm111, %v100, 0
    %v119 = vsel %vm111, %v101, 0
    %v122 = vsel %vm111, %v102, 0
    %v125 = vsel %vm111, %v103, 0
    %v128 = vsel %vm111, %v104, 0
    %v131 = vsel %vm111, %v105, 0
    %v134 = vsel %vm111, %v106, 0
    %v137 = vsel %vm111, %v107, 0
    %v140 = vsel %vm111, %v108, 0
    %v143 = vsel %vm111, %v109, 0
    %v146 = vsel %vm111, %v110, 0
    %148 = vmatprep.subr.mxu0 0.0
    %149 = vmatpush1.msra.mxu0 %v84
    %150 = vmatprep.subr.mxu0 0.0
    %151 = vmatpush1.msra.mxu0 %v85
    %152 = vmatprep.subr.mxu0 0.0
    %153 = vmatpush1.msra.mxu0 %v86
    %154 = vmatprep.subr.mxu0 0.0
    %155 = vmatpush1.msra.mxu0 %v87
    %156 = vmatprep.subr.mxu0 0.0
    %157 = vmatpush1.msra.mxu0 %v88
    %158 = vmatprep.subr.mxu0 0.0
    %159 = vmatpush1.msra.mxu0 %v89
    %160 = vmatprep.subr.mxu0 0.0
    %161 = vmatpush1.msra.mxu0 %v90
    %162 = vmatprep.subr.mxu0 0.0
    %163 = vmatpush1.msra.mxu0 %v91
    %164 = vmatprep.subr.mxu0 0.0
    %165 = vmatpush1.msra.mxu0 %v92
    %166 = vmatprep.subr.mxu0 0.0
    %167 = vmatpush1.msra.mxu0 %v93
    %168 = vmatprep.subr.mxu0 0.0
    %169 = vmatpush1.msra.mxu0 %v94
    %170 = vmatprep.subr.mxu0 0.0
    %171 = vmatpush1.msra.mxu0 %v95
    %172 = vmatprep.subr.mxu0 0.0
    %173 = vmatpush1.msra.mxu0 %v96
    %174 = vmatprep.subr.mxu0 0.0
    %175 = vmatpush1.msra.mxu0 %v97
    %176 = vmatprep.subr.mxu0 0.0
    %177 = vmatpush1.msra.mxu0 %v98
    %178 = vmatprep.subr.mxu0 0.0
    %179 = vmatpush1.msra.mxu0 0.0
    %180 = vmatprep.subr.mxu0 0.0
    %181 = vmatpush1.msra.mxu0 0.0
    %182 = vmatprep.subr.mxu0 0.0
    %183 = vmatpush1.msra.mxu0 0.0
    %184 = vmatprep.subr.mxu0 0.0
    %185 = vmatpush1.msra.mxu0 0.0
    %186 = vmatprep.subr.mxu0 0.0
    %187 = vmatpush1.msra.mxu0 0.0
    %188 = vmatprep.subr.mxu0 0.0
    %189 = vmatpush1.msra.mxu0 0.0
    %190 = vmatprep.subr.mxu0 0.0
    %191 = vmatpush1.msra.mxu0 0.0
    %192 = vmatprep.subr.mxu0 0.0
    %193 = vmatpush1.msra.mxu0 0.0
    %194 = vmatprep.subr.mxu0 0.0
    %195 = vmatpush1.msra.mxu0 0.0
    %196 = vmatprep.subr.mxu0 0.0
    %197 = vmatpush1.msra.mxu0 0.0
    %198 = vmatprep.subr.mxu0 0.0
    %199 = vmatpush1.msra.mxu0 0.0
    %200 = vmatprep.subr.mxu0 0.0
    %201 = vmatpush1.msra.mxu0 0.0
    %202 = vmatprep.subr.mxu0 0.0
    %203 = vmatpush1.msra.mxu0 0.0
    %204 = vmatprep.subr.mxu0 0.0
    %205 = vmatpush1.msra.mxu0 0.0
    %206 = vmatprep.subr.mxu0 0.0
    %207 = vmatpush1.msra.mxu0 0.0
    %208 = vmatprep.subr.mxu0 0.0
    %209 = vmatpush1.msra.mxu0 0.0
    %210 = vmatprep.subr.mxu0 0.0
    %211 = vmatpush1.msra.mxu0 0.0
    %212 = vmatprep.mubr.f32.mxu0 0.0
    %213 = vmatmul.mubr.f32.gmra.mrb[0].mxu0 %v113
    %v214 = vpop.f32.mrb[0].mxu0
    %v215 = vadd.f32 0.0, %v214
    %v216 = vpop.f32.mrb[0].mxu0
    %217 = vmatprep.mubr.f32.mxu0 0.0
    %218 = vmatmul.mubr.f32.gmra.mrb[0].mxu0 %v116
    %v219 = vpop.f32.mrb[0].mxu0
    %v220 = vadd.f32 0.0, %v219
    %v221 = vpop.f32.mrb[0].mxu0
    %222 = vmatprep.mubr.f32.mxu0 0.0
    %223 = vmatmul.mubr.f32.gmra.mrb[0].mxu0 %v119
    %v224 = vpop.f32.mrb[0].mxu0
    %v225 = vadd.f32 0.0, %v224
    %v226 = vpop.f32.mrb[0].mxu0
    %227 = vmatprep.mubr.f32.mxu0 0.0
    %228 = vmatmul.mubr.f32.gmra.mrb[0].mxu0 %v122
    %v229 = vpop.f32.mrb[0].mxu0
    %v230 = vadd.f32 0.0, %v229
    %v231 = vpop.f32.mrb[0].mxu0
    %232 = vmatprep.mubr.f32.mxu0 0.0
    %233 = vmatmul.mubr.f32.gmra.mrb[0].mxu0 %v125
    %v234 = vpop.f32.mrb[0].mxu0
    %v235 = vadd.f32 0.0, %v234
    %v236 = vpop.f32.mrb[0].mxu0
    %237 = vmatprep.mubr.f32.mxu0 0.0
    %238 = vmatmul.mubr.f32.gmra.mrb[0].mxu0 %v128
    %v239 = vpop.f32.mrb[0].mxu0
    %v240 = vadd.f32 0.0, %v239
    %v241 = vpop.f32.mrb[0].mxu0
    %242 = vmatprep.mubr.f32.mxu0 0.0
    %243 = vmatmul.mubr.f32.gmra.mrb[0].mxu0 %v131
    %v244 = vpop.f32.mrb[0].mxu0
    %v245 = vadd.f32 0.0, %v244
    %v246 = vpop.f32.mrb[0].mxu0
    %247 = vmatprep.mubr.f32.mxu0 0.0
    %248 = vmatmul.mubr.f32.gmra.mrb[0].mxu0 %v134
    %v249 = vpop.f32.mrb[0].mxu0
    %v250 = vadd.f32 0.0, %v249
    %v251 = vpop.f32.mrb[0].mxu0
    %252 = vmatprep.mubr.f32.mxu0 0.0
    %253 = vmatmul.mubr.f32.gmra.mrb[0].mxu0 %v137
    %v254 = vpop.f32.mrb[0].mxu0
    %v255 = vadd.f32 0.0, %v254
    %v256 = vpop.f32.mrb[0].mxu0
    %257 = vmatprep.mubr.f32.mxu0 0.0
    %258 = vmatmul.mubr.f32.gmra.mrb[0].mxu0 %v140
    %v259 = vpop.f32.mrb[0].mxu0
    %v260 = vadd.f32 0.0, %v259
    %v261 = vpop.f32.mrb[0].mxu0
    %262 = vmatprep.mubr.f32.mxu0 0.0
    %263 = vmatmul.mubr.f32.gmra.mrb[0].mxu0 %v143
    %v264 = vpop.f32.mrb[0].mxu0
    %v265 = vadd.f32 0.0, %v264
    %v266 = vpop.f32.mrb[0].mxu0
    %267 = vmatprep.mubr.f32.mxu0 0.0
    %268 = vmatmul.mubr.f32.gmra.mrb[0].mxu0 %v146
    %v269 = vpop.f32.mrb[0].mxu0
    %v270 = vadd.f32 0.0, %v269
    %v271 = vpop.f32.mrb[0].mxu0
    %272 = vdwg.mxu0
    %273 = vst [vmem:[#allocation8] sm:$0xff] %v215
    %274 = vst [vmem:[#allocation8 + $0x8] sm:$0xff] %v220
    %275 = vst [vmem:[#allocation8 + $0x10] sm:$0xff] %v225
    %276 = vst [vmem:[#allocation8 + $0x18] sm:$0xff] %v230
    %277 = vst [vmem:[#allocation8 + $0x20] sm:$0xff] %v235
    %278 = vst [vmem:[#allocation8 + $0x28] sm:$0xff] %v240
    %279 = vst [vmem:[#allocation8 + $0x30] sm:$0xff] %v245
    %280 = vst [vmem:[#allocation8 + $0x38] sm:$0xff] %v250
    %281 = vst [vmem:[#allocation8 + $0x40] sm:$0xff] %v255
    %282 = vst [vmem:[#allocation8 + $0x48] sm:$0xff] %v260
    %283 = vst [vmem:[#allocation8 + $0x50] sm:$0xff] %v265
    %284 = vst [vmem:[#allocation8 + $0x58] sm:$0xff] %v270
    // Predicated region
    $region22: #{tpu_custom_call.1} parent=1 // pred_check
      _
    $region23: #{tpu_custom_call.1} parent=1 // pred_check_branch
      %286 = sbr.rel (0) target = $region25
    $region24: #{tpu_custom_call.1} parent=1 // pred_region
      %s288 = ssub.s32 1536, 1536
      %289 = vsyncadd [#allocation5], %s288
      %s290 = sshll.u32 [#allocation8], 4
      %s291 = int_to_ptr.vmem [resolvable:$true] %s290
      %296 = dma.vmem_to_hbm [thread:$0]  %s291, 1536, %s2, [#allocation5], 128, 128, 8
    $region25: #{tpu_custom_call.1} parent=1 // pred_fallthru
      _
    // Predicated region
    $region26: #{tpu_custom_call.1} parent=1 // pred_check
      _
    $region27: #{tpu_custom_call.1} parent=1 // pred_check_branch
      %298 = sbr.rel (0) target = $region29
    $region28: #{tpu_custom_call.1} parent=1 // pred_region
      %299 = dma.done [#allocation5], 1536
    $region29: #{tpu_custom_call.1} parent=1 // pred_fallthru
      _
    %300 = vsyncpa [#allocation4], 1
    %301 = vsyncpa [#allocation7], 1
    %302 = vsyncpa [#allocation5], 1

</llo_original>
